<compile_context>
chip_gen: v6e
topology: v6e:2x2x1
jax: 0.10.0
libtpu: 0.0.40
codegen_flags: <defaults>
</compile_context>

<pallas_src>
import jax
import jax.numpy as jnp
from jax.experimental import pallas as pl
from jax.experimental.pallas import tpu as pltpu

_INV_SQRT2 = 0.7071067811865476


def dnm_conv_kernel(x_ref, lnw_ref, lnb_ref, w_ref, b_ref, o_ref):
    """One block: x_ref/o_ref are (block_b, N, D); params are full (tiny) arrays."""
    xf = x_ref[...].astype(jnp.float32)                      # (Bt, N, D)

    # --- LayerNorm over D (biased variance, eps=1e-5, f32 math like PyTorch).
    mean = jnp.mean(xf, axis=-1, keepdims=True)
    var = jnp.mean(jnp.square(xf - mean), axis=-1, keepdims=True)
    y = (xf - mean) * jax.lax.rsqrt(var + 1e-5)
    y = y * lnw_ref[...].astype(jnp.float32) + lnb_ref[...].astype(jnp.float32)

    # --- Folded synapse + dendrite:
    #     u[b,o,d] = sum_n w_eff[o,n] * y[b,n,d] + bias[o]
    w = w_ref[...].astype(jnp.float32)                       # (O, N)
    bias = b_ref[...].astype(jnp.float32)                    # (O, 1)
    bt = xf.shape[0]
    w_b = jnp.broadcast_to(w[None], (bt,) + w.shape)         # (Bt, O, N), hoisted once
    u = jnp.einsum('bon,bnd->bod', w_b, y,
                   preferred_element_type=jnp.float32)       # (Bt, O, D) on the MXU
    u = u + bias[None]                                       # broadcast (1, O, 1)

    # --- Soma: exact GELU (erf form), matching torch.nn.GELU default.
    g = 0.5 * u * (1.0 + jax.lax.erf(u * _INV_SQRT2))

    # --- Gate: out = x * (g + 1); O == N so (Bt, O, D) aligns with (Bt, N, D).
    o_ref[...] = (xf * (g + 1.0)).astype(o_ref.dtype)


def _choose_block_b(B, N, D, itemsize):
    """Batches per block: ~2 MiB x blocks, exact divisor of B, >= 2 grid steps."""
    target_bytes = 2 * 1024 * 1024
    bt = max(1, target_bytes // (N * D * itemsize))
    if B >= 2:
        bt = min(bt, B // 2)   # keep >= 2 parallel grid steps (megacore / 2 TCs)
    bt = max(1, min(bt, B))
    while B % bt:              # avoid padded partial blocks
        bt -= 1
    return bt


def dnm_conv_forward(x, ln_w, ln_b, sw, sb, dw, *, block_b=None):
    B, N, D = x.shape
    O, M, Nw = sw.shape
    assert Nw == N, "sw last dim must equal num_patches"
    assert O == N, "out_channel must equal num_patches for the final x * (out + 1)"

    # Algebraic fold (host-side, f32): removes the branch loop and the sb DMA.
    dw32 = dw.astype(jnp.float32)
    w_eff = jnp.einsum('om,omn->on', dw32, sw.astype(jnp.float32))            # (O, N)
    bias = jnp.sum(dw32 * jnp.sum(sb.astype(jnp.float32), axis=-1), axis=-1)  # (O,)
    bias2 = bias.reshape(O, 1)
    lnw2 = ln_w.reshape(1, D)
    lnb2 = ln_b.reshape(1, D)

    itemsize = jnp.dtype(x.dtype).itemsize
    if block_b is None:
        block_b = _choose_block_b(B, N, D, itemsize)
    assert B % block_b == 0
    grid = (B // block_b,)

    cost = pl.CostEstimate(
        flops=int(2 * B * O * N * D + 10 * B * N * D),
        transcendentals=int(B * O * D),
        bytes_accessed=int(2 * B * N * D * itemsize + (O * N + O + 2 * D) * 4),
    )

    return pl.pallas_call(
        dnm_conv_kernel,
        out_shape=jax.ShapeDtypeStruct((B, N, D), x.dtype),
        grid_spec=pltpu.PrefetchScalarGridSpec(
            num_scalar_prefetch=0,
            grid=grid,
            in_specs=[
                pl.BlockSpec((block_b, N, D), lambda b: (b, 0, 0)),  # x
                pl.BlockSpec((1, D), lambda b: (0, 0)),              # LN weight
                pl.BlockSpec((1, D), lambda b: (0, 0)),              # LN bias
                pl.BlockSpec((O, N), lambda b: (0, 0)),              # folded weight
                pl.BlockSpec((O, 1), lambda b: (0, 0)),              # folded bias
            ],
            out_specs=pl.BlockSpec((block_b, N, D), lambda b: (b, 0, 0)),
        ),
        compiler_params=pltpu.CompilerParams(
            dimension_semantics=("parallel",)),
        cost_estimate=cost,
    )(x, lnw2, lnb2, w_eff, bias2)


def dnm_conv_ref(x, ln_w, ln_b, sw, sb, dw):
    """Pure-JAX reference following the PyTorch forward literally."""
    B, N, D = x.shape
    O, M, _ = sw.shape
    mean = x.mean(-1, keepdims=True)
    var = ((x - mean) ** 2).mean(-1, keepdims=True)
    out = (x - mean) / jnp.sqrt(var + 1e-5) * ln_w + ln_b      # (B, N, D)
    out = jnp.transpose(out, (0, 2, 1))                         # (B, D, N)
    out = jnp.broadcast_to(out[:, :, None, None, :], (B, D, O, M, N))
    out = sw * out + sb
    out = out.sum(axis=4)                                       # (B, D, O, M)
    out = dw * out
    out = out.sum(axis=3)                                       # (B, D, O)
    out = 0.5 * out * (1.0 + jax.lax.erf(out / jnp.sqrt(2.0)))  # exact GELU
    out = jnp.transpose(out, (0, 2, 1))                         # (B, O, D)
    return x * (out + 1.0)


if __name__ == "__main__":
    # Module config: dim=128, num_patches=16, out_channel=16, num_branch=2
    B, N, D = 8, 16, 128
    O, M = 16, 2

    key = jax.random.PRNGKey(0)
    kx, ksw, ksb, kdw = jax.random.split(key, 4)

    x = jax.random.normal(kx, (B, N, D), dtype=jnp.float32)
    # Parameters (torch.randn equivalents); LayerNorm affine = default (ones/zeros).
    sw = jax.random.normal(ksw, (O, M, N), dtype=jnp.float32)
    sb = jax.random.normal(ksb, (O, M, N), dtype=jnp.float32)
    dw = jax.random.normal(kdw, (O, M), dtype=jnp.float32)
    ln_w = jnp.ones((D,), dtype=jnp.float32)
    ln_b = jnp.zeros((D,), dtype=jnp.float32)

    out = dnm_conv_forward(x, ln_w, ln_b, sw, sb, dw)
    out = jax.block_until_ready(out)

    ref = dnm_conv_ref(x, ln_w, ln_b, sw, sb, dw)
    assert out.shape == (B, N, D)
    err = float(jnp.max(jnp.abs(out - ref)))
    assert jnp.allclose(out, ref, rtol=1e-3, atol=1e-3), f"max err {err}"
    print("KERNEL_OK")
</pallas_src>

<mosaic_0001>
module attributes {stable_mosaic.version = 11 : i64} {
  func.func @dnm_conv_kernel(%arg0: i32, %arg1: memref<4x16x128xf32, #tpu.memory_space<vmem>>, %arg2: memref<1x128xf32, #tpu.memory_space<vmem>>, %arg3: memref<1x128xf32, #tpu.memory_space<vmem>>, %arg4: memref<16x16xf32, #tpu.memory_space<vmem>>, %arg5: memref<16x1xf32, #tpu.memory_space<vmem>>, %arg6: memref<4x16x128xf32, #tpu.memory_space<vmem>>) attributes {dimension_semantics = [#tpu.dimension_semantics<parallel>], iteration_bounds = array<i64: 2>, scalar_prefetch = 0 : i64, scratch_operands = 0 : i64, tpu.core_type = #tpu.core_type<tc>, window_params = [{transform_indices = @transform_0, window_bounds = array<i64: 4, 16, 128>}, {pipeline_mode = #tpu.pipeline_mode<synchronous>, transform_indices = @transform_1, window_bounds = array<i64: 1, 128>}, {pipeline_mode = #tpu.pipeline_mode<synchronous>, transform_indices = @transform_2, window_bounds = array<i64: 1, 128>}, {pipeline_mode = #tpu.pipeline_mode<synchronous>, transform_indices = @transform_3, window_bounds = array<i64: 16, 16>}, {pipeline_mode = #tpu.pipeline_mode<synchronous>, transform_indices = @transform_4, window_bounds = array<i64: 16, 1>}, {transform_indices = @transform_5, window_bounds = array<i64: 4, 16, 128>}]} {
    %c0 = arith.constant 0 : index
    %c0_0 = arith.constant 0 : index
    %c0_1 = arith.constant 0 : index
    %0 = vector.load %arg1[%c0, %c0_0, %c0_1] : memref<4x16x128xf32, #tpu.memory_space<vmem>>, vector<4x16x128xf32>
    %cst = arith.constant dense<0.000000e+00> : vector<4x16xf32>
    %1 = vector.multi_reduction <add>, %0, %cst [2] : vector<4x16x128xf32> to vector<4x16xf32>
    %2 = vector.shape_cast %1 : vector<4x16xf32> to vector<4x16x1xf32>
    %cst_2 = arith.constant 1.280000e+02 : f32
    %3 = vector.broadcast %cst_2 : f32 to vector<4x16x1xf32>
    %4 = arith.divf %2, %3 : vector<4x16x1xf32>
    %5 = vector.broadcast %4 : vector<4x16x1xf32> to vector<4x16x128xf32>
    %6 = arith.subf %0, %5 : vector<4x16x128xf32>
    %7 = arith.mulf %6, %6 : vector<4x16x128xf32>
    %cst_3 = arith.constant dense<0.000000e+00> : vector<4x16xf32>
    %8 = vector.multi_reduction <add>, %7, %cst_3 [2] : vector<4x16x128xf32> to vector<4x16xf32>
    %9 = vector.shape_cast %8 : vector<4x16xf32> to vector<4x16x1xf32>
    %cst_4 = arith.constant 1.280000e+02 : f32
    %10 = vector.broadcast %cst_4 : f32 to vector<4x16x1xf32>
    %11 = arith.divf %9, %10 : vector<4x16x1xf32>
    %12 = vector.broadcast %4 : vector<4x16x1xf32> to vector<4x16x128xf32>
    %13 = arith.subf %0, %12 : vector<4x16x128xf32>
    %cst_5 = arith.constant 9.99999974E-6 : f32
    %14 = vector.broadcast %cst_5 : f32 to vector<4x16x1xf32>
    %15 = arith.addf %11, %14 : vector<4x16x1xf32>
    %16 = math.rsqrt %15 : vector<4x16x1xf32>
    %17 = vector.broadcast %16 : vector<4x16x1xf32> to vector<4x16x128xf32>
    %18 = arith.mulf %13, %17 : vector<4x16x128xf32>
    %c0_6 = arith.constant 0 : index
    %c0_7 = arith.constant 0 : index
    %19 = vector.load %arg2[%c0_6, %c0_7] : memref<1x128xf32, #tpu.memory_space<vmem>>, vector<1x128xf32>
    %20 = vector.shape_cast %19 : vector<1x128xf32> to vector<1x1x128xf32>
    %21 = vector.broadcast %20 : vector<1x1x128xf32> to vector<4x16x128xf32>
    %22 = arith.mulf %18, %21 : vector<4x16x128xf32>
    %c0_8 = arith.constant 0 : index
    %c0_9 = arith.constant 0 : index
    %23 = vector.load %arg3[%c0_8, %c0_9] : memref<1x128xf32, #tpu.memory_space<vmem>>, vector<1x128xf32>
    %24 = vector.shape_cast %23 : vector<1x128xf32> to vector<1x1x128xf32>
    %25 = vector.broadcast %24 : vector<1x1x128xf32> to vector<4x16x128xf32>
    %26 = arith.addf %22, %25 : vector<4x16x128xf32>
    %c0_10 = arith.constant 0 : index
    %c0_11 = arith.constant 0 : index
    %27 = vector.load %arg4[%c0_10, %c0_11] : memref<16x16xf32, #tpu.memory_space<vmem>>, vector<16x16xf32>
    %c0_12 = arith.constant 0 : index
    %c0_13 = arith.constant 0 : index
    %28 = vector.load %arg5[%c0_12, %c0_13] : memref<16x1xf32, #tpu.memory_space<vmem>>, vector<16x1xf32>
    %29 = vector.shape_cast %27 : vector<16x16xf32> to vector<1x16x16xf32>
    %30 = vector.shape_cast %29 : vector<1x16x16xf32> to vector<1x16x16xf32>
    %31 = vector.broadcast %30 : vector<1x16x16xf32> to vector<4x16x16xf32>
    "tpu.trace_start"() <{level = 10 : i32, message = "bon,bnd->bod"}> : () -> ()
    %cst_14 = arith.constant dense<0.000000e+00> : vector<4x16x128xf32>
    %32 = tpu.matmul %31, %26, %cst_14 {dimension_numbers = #tpu.dot_dimension_numbers<[2], [1], [1], [2], [0, 0, 0, 1, 1, 2], [0], [0]>} : vector<4x16x16xf32>, vector<4x16x128xf32>, vector<4x16x128xf32> -> vector<4x16x128xf32>
    "tpu.trace_stop"() : () -> ()
    %33 = vector.shape_cast %28 : vector<16x1xf32> to vector<1x16x1xf32>
    %34 = vector.broadcast %33 : vector<1x16x1xf32> to vector<4x16x128xf32>
    %35 = arith.addf %32, %34 : vector<4x16x128xf32>
    %cst_15 = arith.constant 5.000000e-01 : f32
    %36 = vector.broadcast %cst_15 : f32 to vector<4x16x128xf32>
    %37 = arith.mulf %36, %35 : vector<4x16x128xf32>
    %cst_16 = arith.constant 0.707106769 : f32
    %38 = vector.broadcast %cst_16 : f32 to vector<4x16x128xf32>
    %39 = arith.mulf %35, %38 : vector<4x16x128xf32>
    %40 = math.erf %39 : vector<4x16x128xf32>
    %cst_17 = arith.constant 1.000000e+00 : f32
    %41 = vector.broadcast %cst_17 : f32 to vector<4x16x128xf32>
    %42 = arith.addf %41, %40 : vector<4x16x128xf32>
    %43 = arith.mulf %37, %42 : vector<4x16x128xf32>
    %cst_18 = arith.constant 1.000000e+00 : f32
    %44 = vector.broadcast %cst_18 : f32 to vector<4x16x128xf32>
    %45 = arith.addf %43, %44 : vector<4x16x128xf32>
    %46 = arith.mulf %0, %45 : vector<4x16x128xf32>
    %c0_19 = arith.constant 0 : index
    %c0_20 = arith.constant 0 : index
    %c0_21 = arith.constant 0 : index
    %47 = vector.load %arg6[%c0_19, %c0_20, %c0_21] : memref<4x16x128xf32, #tpu.memory_space<vmem>>, vector<4x16x128xf32>
    tpu.vector_store %arg6[%c0_19, %c0_20, %c0_21], %46 {strides = array<i32>} : memref<4x16x128xf32, #tpu.memory_space<vmem>>, vector<4x16x128xf32>,
    return
  }
  func.func @transform_0(%arg0: i32) -> (i32, i32, i32) {
    %c0_i32 = arith.constant 0 : i32
    %c0_i32_0 = arith.constant 0 : i32
    %c0_i32_1 = arith.constant 0 : i32
    return %arg0, %c0_i32, %c0_i32_0 : i32, i32, i32
  }
  func.func @transform_1(%arg0: i32) -> (i32, i32) {
    %c0_i32 = arith.constant 0 : i32
    %c0_i32_0 = arith.constant 0 : i32
    %c0_i32_1 = arith.constant 0 : i32
    return %c0_i32, %c0_i32_0 : i32, i32
  }
  func.func @transform_2(%arg0: i32) -> (i32, i32) {
    %c0_i32 = arith.constant 0 : i32
    %c0_i32_0 = arith.constant 0 : i32
    %c0_i32_1 = arith.constant 0 : i32
    return %c0_i32, %c0_i32_0 : i32, i32
  }
  func.func @transform_3(%arg0: i32) -> (i32, i32) {
    %c0_i32 = arith.constant 0 : i32
    %c0_i32_0 = arith.constant 0 : i32
    %c0_i32_1 = arith.constant 0 : i32
    return %c0_i32, %c0_i32_0 : i32, i32
  }
  func.func @transform_4(%arg0: i32) -> (i32, i32) {
    %c0_i32 = arith.constant 0 : i32
    %c0_i32_0 = arith.constant 0 : i32
    %c0_i32_1 = arith.constant 0 : i32
    return %c0_i32, %c0_i32_0 : i32, i32
  }
  func.func @transform_5(%arg0: i32) -> (i32, i32, i32) {
    %c0_i32 = arith.constant 0 : i32
    %c0_i32_0 = arith.constant 0 : i32
    %c0_i32_1 = arith.constant 0 : i32
    return %arg0, %c0_i32, %c0_i32_0 : i32, i32, i32
  }
}

</mosaic_0001>

<llo_original>
// kernel: tpu_custom_call.1
$region0: #{tpu_custom_call.1}
  #allocation0 [shape = 'u32[]', space=smem, size = 0x4, offset = 0x4, fixed_abs, tag = 'smem constant byte address 0x4 - core index']
  #allocation1 [shape = 'u32[144,128]{1,0:T(1,128)}', space=vmem, size = 0x12000, scoped, tag = 'internal scratch']
  %s0 = inlined_call_operand.hbm [shape: f32[8,16,128], index: 0, kind: input, shape index: {}]
  %s1 = inlined_call_operand.vmem [shape: f32[1,128], index: 1, kind: input, shape index: {}]
  %s2 = inlined_call_operand.vmem [shape: f32[1,128], index: 2, kind: input, shape index: {}]
  %s3 = inlined_call_operand.vmem [shape: f32[16,16], index: 3, kind: input, shape index: {}]
  %s4 = inlined_call_operand.vmem [shape: f32[16,1], index: 4, kind: input, shape index: {}]
  %s5 = inlined_call_operand.hbm [shape: f32[8,16,128], index: 5, kind: output, shape index: {}]
  %s6 = sld [smem:[#allocation0]]
  $region57: #{tpu_custom_call.1} parent=0
    _
  %s8 = ssub.s32 1, %s6
  %s9 = scalar_select 0, %s8, %s6
  $region1: #{tpu_custom_call.1} parent=0
    #allocation2 [shape = 'u8[65536]{0}', space=vmem, size = 0x10000, scoped, tag = 'input window, operand 0']
    #allocation3 [shape = 's32[2]{0}', space=sflag, size = 0x8, scoped, tag = 'scoped memory for tpu_custom_call.1']
    #allocation4 [shape = 's32[2]{0}', space=sflag, size = 0x8, scoped, tag = 'scoped memory for tpu_custom_call.1']
    #allocation5 [shape = 'u8[65536]{0}', space=vmem, size = 0x10000, scoped, tag = 'output window, operand 0']
    %10 = vsyncpa [#allocation3], 0
    %s11 = scalar_lea.sflag [#allocation3], 1
    %12 = vsyncpa %s11, 0
    %13 = vsyncpa [#allocation4], 0
    %s14 = scalar_lea.sflag [#allocation4], 1
    %15 = vsyncpa %s14, 0
    loop: start=0, step=1, limit=4
    $region2: #{tpu_custom_call.1} parent=1 // loop_pre_header
      _
    $region3: #{tpu_custom_call.1} parent=1 // loop_header
      %s17 = sphi 0, %s21
      %p18 = scmp.ge.s32.totalorder %s17, 4
      %s27 = sphi 0, %s29
      %s30 = sphi 0, %s27
      %s31 = sphi 0, %s30
      %s47 = sphi 0, %s31
      %s51 = sphi 0, %s51
      %s53 = sphi 0, %s51
      %s54 = sphi 0, %s53
      %s68 = sphi 0, %s54
      %s72 = sphi 0, %s72
      %s74 = sphi 0, %s72
      %s75 = sphi 0, %s74
      %s89 = sphi 0, %s75
      %s93 = sphi 0, %s93
      %s95 = sphi 0, %s93
      %s96 = sphi 0, %s95
      %s110 = sphi 0, %s96
      %s114 = sphi 0, %s114
      %s116 = sphi 0, %s114
      %s117 = sphi 0, %s116
      %s131 = sphi 0, %s117
      %s137 = sphi 0, %s139
      %s140 = sphi 0, %s137
      %s141 = sphi 0, %s140
      %s157 = sphi 0, %s141
    $region4: #{tpu_custom_call.1} parent=1 // loop_header_branch
      %20 = sbr.rel (%p18) target = $region8
    $region5: #{tpu_custom_call.1} parent=1 // loop_body
      %s22 = ssub.s32 %s17, 1
      %s23 = ssub.s32 %s17, 2
      %s24 = sadd.s32 %s17, 1
      %s25 = ssub.s32 %s17, %s24
      %p26 = scmp.eq.s32.totalorder %s25, 0
      %s28 = sadd.s32 %s27, 1
      %s29 = scalar_select %p26, %s27, %s28
      %p32 = pneg %p26
      %p33 = scmp.eq.s32.totalorder %s17, 1
      %p34 = por %p32, %p33
      %p35 = scmp.ne.s32.totalorder %s27, %s30
      %p36 = scmp.eq.s32.totalorder %s17, 0
      %p37 = por %p35, %p36
      %p38 = scmp.ne.s32.totalorder %s27, %s30
      %p39 = scmp.eq.s32.totalorder %s22, 1
      %p40 = por %p38, %p39
      %p41 = scmp.ne.s32.totalorder %s30, %s31
      %p42 = scmp.eq.s32.totalorder %s22, 0
      %p43 = por %p41, %p42
      %p44 = scmp.ne.s32.totalorder %s30, %s31
      %p45 = scmp.eq.s32.totalorder %s23, 1
      %p46 = por %p44, %p45
      %p48 = scmp.ne.s32.totalorder %s31, %s47
      %p49 = scmp.eq.s32.totalorder %s23, 0
      %p50 = por %p48, %p49
      %s52 = sadd.s32 %s51, 1
      %p55 = scmp.eq.s32.totalorder %s17, 1
      %p56 = scmp.ne.s32.totalorder %s51, %s53
      %p57 = scmp.eq.s32.totalorder %s17, 0
      %p58 = por %p56, %p57
      %p59 = scmp.ne.s32.totalorder %s51, %s53
      %p60 = scmp.eq.s32.totalorder %s22, 1
      %p61 = por %p59, %p60
      %p62 = scmp.ne.s32.totalorder %s53, %s54
      %p63 = scmp.eq.s32.totalorder %s22, 0
      %p64 = por %p62, %p63
      %p65 = scmp.ne.s32.totalorder %s53, %s54
      %p66 = scmp.eq.s32.totalorder %s23, 1
      %p67 = por %p65, %p66
      %p69 = scmp.ne.s32.totalorder %s54, %s68
      %p70 = scmp.eq.s32.totalorder %s23, 0
      %p71 = por %p69, %p70
      %s73 = sadd.s32 %s72, 1
      %p76 = scmp.eq.s32.totalorder %s17, 1
      %p77 = scmp.ne.s32.totalorder %s72, %s74
      %p78 = scmp.eq.s32.totalorder %s17, 0
      %p79 = por %p77, %p78
      %p80 = scmp.ne.s32.totalorder %s72, %s74
      %p81 = scmp.eq.s32.totalorder %s22, 1
      %p82 = por %p80, %p81
      %p83 = scmp.ne.s32.totalorder %s74, %s75
      %p84 = scmp.eq.s32.totalorder %s22, 0
      %p85 = por %p83, %p84
      %p86 = scmp.ne.s32.totalorder %s74, %s75
      %p87 = scmp.eq.s32.totalorder %s23, 1
      %p88 = por %p86, %p87
      %p90 = scmp.ne.s32.totalorder %s75, %s89
      %p91 = scmp.eq.s32.totalorder %s23, 0
      %p92 = por %p90, %p91
      %s94 = sadd.s32 %s93, 1
      %p97 = scmp.eq.s32.totalorder %s17, 1
      %p98 = scmp.ne.s32.totalorder %s93, %s95
      %p99 = scmp.eq.s32.totalorder %s17, 0
      %p100 = por %p98, %p99
      %p101 = scmp.ne.s32.totalorder %s93, %s95
      %p102 = scmp.eq.s32.totalorder %s22, 1
      %p103 = por %p101, %p102
      %p104 = scmp.ne.s32.totalorder %s95, %s96
      %p105 = scmp.eq.s32.totalorder %s22, 0
      %p106 = por %p104, %p105
      %p107 = scmp.ne.s32.totalorder %s95, %s96
      %p108 = scmp.eq.s32.totalorder %s23, 1
      %p109 = por %p107, %p108
      %p111 = scmp.ne.s32.totalorder %s96, %s110
      %p112 = scmp.eq.s32.totalorder %s23, 0
      %p113 = por %p111, %p112
      %s115 = sadd.s32 %s114, 1
      %p118 = scmp.eq.s32.totalorder %s17, 1
      %p119 = scmp.ne.s32.totalorder %s114, %s116
      %p120 = scmp.eq.s32.totalorder %s17, 0
      %p121 = por %p119, %p120
      %p122 = scmp.ne.s32.totalorder %s114, %s116
      %p123 = scmp.eq.s32.totalorder %s22, 1
      %p124 = por %p122, %p123
      %p125 = scmp.ne.s32.totalorder %s116, %s117
      %p126 = scmp.eq.s32.totalorder %s22, 0
      %p127 = por %p125, %p126
      %p128 = scmp.ne.s32.totalorder %s116, %s117
      %p129 = scmp.eq.s32.totalorder %s23, 1
      %p130 = por %p128, %p129
      %p132 = scmp.ne.s32.totalorder %s117, %s131
      %p133 = scmp.eq.s32.totalorder %s23, 0
      %p134 = por %p132, %p133
      %s135 = ssub.s32 %s17, %s24
      %p136 = scmp.eq.s32.totalorder %s135, 0
      %s138 = sadd.s32 %s137, 1
      %s139 = scalar_select %p136, %s137, %s138
      %p142 = pneg %p136
      %p143 = scmp.eq.s32.totalorder %s17, 1
      %p144 = por %p142, %p143
      %p145 = scmp.ne.s32.totalorder %s137, %s140
      %p146 = scmp.eq.s32.totalorder %s17, 0
      %p147 = por %p145, %p146
      %p148 = scmp.ne.s32.totalorder %s137, %s140
      %p149 = scmp.eq.s32.totalorder %s22, 1
      %p150 = por %p148, %p149
      %p151 = scmp.ne.s32.totalorder %s140, %s141
      %p152 = scmp.eq.s32.totalorder %s22, 0
      %p153 = por %p151, %p152
      %p154 = scmp.ne.s32.totalorder %s140, %s141
      %p155 = scmp.eq.s32.totalorder %s23, 1
      %p156 = por %p154, %p155
      %p158 = scmp.ne.s32.totalorder %s141, %s157
      %p159 = scmp.eq.s32.totalorder %s23, 0
      %p160 = por %p158, %p159
      %p161 = scmp.le.s32.totalorder 1, %s17
      %p162 = scmp.lt.s32.totalorder %s17, 3
      %p163 = pnand %p161, %p162
      %p164 = pneg %p163
      // Predicated region
      $region9: #{tpu_custom_call.1} parent=5 // pred_check
        _
      $region10: #{tpu_custom_call.1} parent=5 // pred_check_branch
        %166 = sbr.rel (%p163) target = $region12
      $region11: #{tpu_custom_call.1} parent=5 // pred_region
        %s167 = ssub.s32 %s17, 1
        // Predicated region
        $region13: #{tpu_custom_call.1} parent=11 // pred_check
          %p168 = pneg %p64
        $region14: #{tpu_custom_call.1} parent=11 // pred_check_branch
          %170 = sbr.rel (%p168) target = $region16
        $region15: #{tpu_custom_call.1} parent=11 // pred_region
          _
        $region16: #{tpu_custom_call.1} parent=11 // pred_fallthru
          _
        // Predicated region
        $region17: #{tpu_custom_call.1} parent=11 // pred_check
          %p171 = pneg %p85
        $region18: #{tpu_custom_call.1} parent=11 // pred_check_branch
          %173 = sbr.rel (%p171) target = $region20
        $region19: #{tpu_custom_call.1} parent=11 // pred_region
          _
        $region20: #{tpu_custom_call.1} parent=11 // pred_fallthru
          _
        // Predicated region
        $region21: #{tpu_custom_call.1} parent=11 // pred_check
          %p174 = pneg %p106
        $region22: #{tpu_custom_call.1} parent=11 // pred_check_branch
          %176 = sbr.rel (%p174) target = $region24
        $region23: #{tpu_custom_call.1} parent=11 // pred_region
          _
        $region24: #{tpu_custom_call.1} parent=11 // pred_fallthru
          _
        // Predicated region
        $region25: #{tpu_custom_call.1} parent=11 // pred_check
          %p177 = pneg %p127
        $region26: #{tpu_custom_call.1} parent=11 // pred_check_branch
          %179 = sbr.rel (%p177) target = $region28
        $region27: #{tpu_custom_call.1} parent=11 // pred_region
          _
        $region28: #{tpu_custom_call.1} parent=11 // pred_fallthru
          _
      $region12: #{tpu_custom_call.1} parent=5 // pred_fallthru
        _
      %p180 = scmp.lt.s32.totalorder %s17, 2
      // Predicated region
      $region29: #{tpu_custom_call.1} parent=5 // pred_check
        %p181 = pneg %p180
      $region30: #{tpu_custom_call.1} parent=5 // pred_check_branch
        %183 = sbr.rel (%p181) target = $region32
      $region31: #{tpu_custom_call.1} parent=5 // pred_region
        // Predicated region
        $region33: #{tpu_custom_call.1} parent=31 // pred_check
          %p184 = pneg %p37
        $region34: #{tpu_custom_call.1} parent=31 // pred_check_branch
          %186 = sbr.rel (%p184) target = $region36
        $region35: #{tpu_custom_call.1} parent=31 // pred_region
          %s187 = sand.u32 %s27, 1
          %s188 = scalar_lea.sflag [#allocation3], %s187
          %s189 = sand.u32 %s27, 1
          %s190 = smul.addr %s189, 64
          %s191 = scalar_lea.vmem [#allocation2], %s190
          %s192 = smul.u32 4, %s17
          %s194 = ssub.s32 1024, 1024
          %195 = vsyncadd %s188, %s194
          %s196 = smul.addr %s192, 2
          %s197 = smul.addr %s196, 128
          %s198 = scalar_lea.hbm %s0, %s197
          %s199 = sshll.u32 %s191, 4
          %s200 = int_to_ptr.vmem [resolvable:$true] %s199
          %205 = dma.hbm_to_vmem [thread:$0]  %s198, 1024, %s200, %s188, 128, 128, 8
        $region36: #{tpu_custom_call.1} parent=31 // pred_fallthru
          _
      $region32: #{tpu_custom_call.1} parent=5 // pred_fallthru
        _
      %p206 = scmp.le.s32.totalorder 1, %s17
      %p207 = scmp.lt.s32.totalorder %s17, 3
      %p208 = pnand %p206, %p207
      %p209 = pneg %p208
      // Predicated region
      $region37: #{tpu_custom_call.1} parent=5 // pred_check
        _
      $region38: #{tpu_custom_call.1} parent=5 // pred_check_branch
        %211 = sbr.rel (%p208) target = $region40
      $region39: #{tpu_custom_call.1} parent=5 // pred_region
        %s212 = ssub.s32 %s17, 1
        %s213 = sand.u32 %s30, 1
        %s214 = scalar_lea.sflag [#allocation3], %s213
        %s215 = sand.u32 %s30, 1
        %s216 = smul.addr %s215, 64
        %s217 = scalar_lea.vmem [#allocation2], %s216
        // Predicated region
        $region41: #{tpu_custom_call.1} parent=39 // pred_check
          %p218 = pneg %p43
        $region42: #{tpu_custom_call.1} parent=39 // pred_check_branch
          %220 = sbr.rel (%p218) target = $region44
        $region43: #{tpu_custom_call.1} parent=39 // pred_region
          %221 = dma.done %s214, 1024
        $region44: #{tpu_custom_call.1} parent=39 // pred_fallthru
          _
        %s222 = sand.u32 %s30, 1
        %s223 = scalar_lea.sflag [#allocation3], %s222
        %s224 = sand.u32 %s30, 1
        %s225 = smul.addr %s224, 64
        %s226 = scalar_lea.vmem [#allocation2], %s225
        %p227 = pneg %p43
        %p228 = pneg %p40
        %p229 = pneg %p64
        %p230 = pneg %p61
        %p231 = pneg %p85
        %p232 = pneg %p82
        %p233 = pneg %p106
        %p234 = pneg %p103
        %p235 = pneg %p127
        %p236 = pneg %p124
        %p237 = pneg %p153
        %p238 = pneg %p150
        %s239 = sand.u32 %s140, 1
        %s240 = scalar_lea.sflag [#allocation4], %s239
        %s241 = sand.u32 %s140, 1
        %s242 = smul.addr %s241, 64
        %s243 = scalar_lea.vmem [#allocation5], %s242
        %s244 = smul.u32 4, %s22
        %s245 = smul.u32 4, %s22
        %v246 = vld [vmem:[%s217] sm:$0xff]
        %v247 = vld [vmem:[%s217 + $0x8] sm:$0xff]
        %v248 = vld [vmem:[%s217 + $0x10] sm:$0xff]
        %v249 = vld [vmem:[%s217 + $0x18] sm:$0xff]
        %v250 = vld [vmem:[%s217 + $0x20] sm:$0xff]
        %v251 = vld [vmem:[%s217 + $0x28] sm:$0xff]
        %v252 = vld [vmem:[%s217 + $0x30] sm:$0xff]
        %v253 = vld [vmem:[%s217 + $0x38] sm:$0xff]
        %254 = vadd.xlane.f32.xlu0 %v246
        %v255 = vpop.xlane.xlu0 %254
        %256 = vadd.xlane.f32.xlu0 %v247
        %v257 = vpop.xlane.xlu0 %256
        %258 = vadd.xlane.f32.xlu0 %v248
        %v259 = vpop.xlane.xlu0 %258
        %260 = vadd.xlane.f32.xlu0 %v249
        %v261 = vpop.xlane.xlu0 %260
        %262 = vadd.xlane.f32.xlu0 %v250
        %v263 = vpop.xlane.xlu0 %262
        %264 = vadd.xlane.f32.xlu0 %v251
        %v265 = vpop.xlane.xlu0 %264
        %266 = vadd.xlane.f32.xlu0 %v252
        %v267 = vpop.xlane.xlu0 %266
        %268 = vadd.xlane.f32.xlu0 %v253
        %v269 = vpop.xlane.xlu0 %268
        %v270 = vrcp.pop 128.0
        %v271 = vmul.f32 %v255, %v270
        %v272 = vmul.f32 %v257, %v270
        %v273 = vmul.f32 %v259, %v270
        %v274 = vmul.f32 %v261, %v270
        %v275 = vmul.f32 %v263, %v270
        %v276 = vmul.f32 %v265, %v270
        %v277 = vmul.f32 %v267, %v270
        %v278 = vmul.f32 %v269, %v270
        %v279 = vsub.f32 %v246, %v271
        %v280 = vsub.f32 %v247, %v272
        %v281 = vsub.f32 %v248, %v273
        %v282 = vsub.f32 %v249, %v274
        %v283 = vsub.f32 %v250, %v275
        %v284 = vsub.f32 %v251, %v276
        %v285 = vsub.f32 %v252, %v277
        %v286 = vsub.f32 %v253, %v278
        %v287 = vmul.f32 %v279, %v279
        %v288 = vmul.f32 %v280, %v280
        %v289 = vmul.f32 %v281, %v281
        %v290 = vmul.f32 %v282, %v282
        %v291 = vmul.f32 %v283, %v283
        %v292 = vmul.f32 %v284, %v284
        %v293 = vmul.f32 %v285, %v285
        %v294 = vmul.f32 %v286, %v286
        %295 = vadd.xlane.f32.xlu0 %v287
        %v296 = vpop.xlane.xlu0 %295
        %297 = vadd.xlane.f32.xlu0 %v288
        %v298 = vpop.xlane.xlu0 %297
        %299 = vadd.xlane.f32.xlu0 %v289
        %v300 = vpop.xlane.xlu0 %299
        %301 = vadd.xlane.f32.xlu0 %v290
        %v302 = vpop.xlane.xlu0 %301
        %303 = vadd.xlane.f32.xlu0 %v291
        %v304 = vpop.xlane.xlu0 %303
        %305 = vadd.xlane.f32.xlu0 %v292
        %v306 = vpop.xlane.xlu0 %305
        %307 = vadd.xlane.f32.xlu0 %v293
        %v308 = vpop.xlane.xlu0 %307
        %309 = vadd.xlane.f32.xlu0 %v294
        %v310 = vpop.xlane.xlu0 %309
        %v311 = vmul.f32 %v296, %v270
        %v312 = vmul.f32 %v298, %v270
        %v313 = vmul.f32 %v300, %v270
        %v314 = vmul.f32 %v302, %v270
        %v315 = vmul.f32 %v304, %v270
        %v316 = vmul.f32 %v306, %v270
        %v317 = vmul.f32 %v308, %v270
        %v318 = vmul.f32 %v310, %v270
        %v319 = vadd.f32 %v311, 1e-05
        %v320 = vadd.f32 %v312, 1e-05
        %v321 = vadd.f32 %v313, 1e-05
        %v322 = vadd.f32 %v314, 1e-05
        %v323 = vadd.f32 %v315, 1e-05
        %v324 = vadd.f32 %v316, 1e-05
        %v325 = vadd.f32 %v317, 1e-05
        %v326 = vadd.f32 %v318, 1e-05
        %v327 = vrsqrt.pop %v319
        %v328 = vrsqrt.pop %v320
        %v329 = vrsqrt.pop %v321
        %v330 = vrsqrt.pop %v322
        %v331 = vrsqrt.pop %v323
        %v332 = vrsqrt.pop %v324
        %v333 = vrsqrt.pop %v325
        %v334 = vrsqrt.pop %v326
        %v335 = vmul.f32 %v279, %v327
        %v336 = vmul.f32 %v280, %v328
        %v337 = vmul.f32 %v281, %v329
        %v338 = vmul.f32 %v282, %v330
        %v339 = vmul.f32 %v283, %v331
        %v340 = vmul.f32 %v284, %v332
        %v341 = vmul.f32 %v285, %v333
        %v342 = vmul.f32 %v286, %v334
        %v343 = vld [vmem:[%s1] sm:$0x1]
        %v345 = vlaneseq
        %v346 = vshrl.u32 %v345, 7
        %v347 = vsub.s32 0, %v346
        %v348 = vrot.slane %v343, %v347
        %v350 = vmul.f32 %v335, %v348
        %v351 = vmul.f32 %v336, %v348
        %v352 = vmul.f32 %v337, %v348
        %v353 = vmul.f32 %v338, %v348
        %v354 = vmul.f32 %v339, %v348
        %v355 = vmul.f32 %v340, %v348
        %v356 = vmul.f32 %v341, %v348
        %v357 = vmul.f32 %v342, %v348
        %v358 = vld [vmem:[%s2] sm:$0x1]
        %v360 = vlaneseq
        %v361 = vshrl.u32 %v360, 7
        %v362 = vsub.s32 0, %v361
        %v363 = vrot.slane %v358, %v362
        %v365 = vadd.f32 %v350, %v363
        %v366 = vadd.f32 %v351, %v363
        %v367 = vadd.f32 %v352, %v363
        %v368 = vadd.f32 %v353, %v363
        %v369 = vadd.f32 %v354, %v363
        %v370 = vadd.f32 %v355, %v363
        %v371 = vadd.f32 %v356, %v363
        %v372 = vadd.f32 %v357, %v363
        %v373 = vld [vmem:[%s3] sm:$0xff]
        %v374 = vld [vmem:[%s3 + $0x8] sm:$0xff]
        %v375 = vld [vmem:[%s4] sm:$0xff]
        %v376 = vld [vmem:[%s4 + $0x8] sm:$0xff]
        %378 = vset.pattern.permute.xlu0 0
        %379 = vperm.xlu0 %378, %v375
        %v380 = vpop.permute.xlu0 %379
        %383 = vset.pattern.permute.xlu0 0
        %384 = vperm.xlu0 %383, %v376
        %v385 = vpop.permute.xlu0 %384
        %vm387 = vcmask 130048
        %v389 = vsel %vm387, %v373, 0
        %v392 = vsel %vm387, %v374, 0
        %394 = vmatprep.subr.mxu0 0.0
        %395 = vmatpush1.msra.mxu0 0.0
        %396 = vmatprep.subr.mxu0 0.0
        %397 = vmatpush1.msra.mxu0 0.0
        %398 = vmatprep.subr.mxu0 0.0
        %399 = vmatpush1.msra.mxu0 0.0
        %400 = vmatprep.subr.mxu0 0.0
        %401 = vmatpush1.msra.mxu0 0.0
        %402 = vmatprep.subr.mxu0 0.0
        %403 = vmatpush1.msra.mxu0 0.0
        %404 = vmatprep.subr.mxu0 0.0
        %405 = vmatpush1.msra.mxu0 0.0
        %406 = vmatprep.subr.mxu0 0.0
        %407 = vmatpush1.msra.mxu0 0.0
        %408 = vmatprep.subr.mxu0 0.0
        %409 = vmatpush1.msra.mxu0 0.0
        %410 = vmatprep.subr.mxu0 0.0
        %411 = vmatpush1.msra.mxu0 0.0
        %412 = vmatprep.subr.mxu0 0.0
        %413 = vmatpush1.msra.mxu0 0.0
        %414 = vmatprep.subr.mxu0 0.0
        %415 = vmatpush1.msra.mxu0 0.0
        %416 = vmatprep.subr.mxu0 0.0
        %417 = vmatpush1.msra.mxu0 0.0
        %418 = vmatprep.subr.mxu0 0.0
        %419 = vmatpush1.msra.mxu0 0.0
        %420 = vmatprep.subr.mxu0 0.0
        %421 = vmatpush1.msra.mxu0 0.0
        %422 = vmatprep.subr.mxu0 0.0
        %423 = vmatpush1.msra.mxu0 %v366
        %424 = vmatprep.subr.mxu0 0.0
        %425 = vmatpush1.msra.mxu0 %v365
        %426 = vmatprep.subr.mxu0 0.0
        %427 = vmatpush2.msra.mxu0 0.0
        %428 = vmatprep.subr.mxu0 0.0
        %429 = vmatpush2.msra.mxu0 0.0
        %430 = vmatprep.subr.mxu0 0.0
        %431 = vmatpush2.msra.mxu0 0.0
        %432 = vmatprep.subr.mxu0 0.0
        %433 = vmatpush2.msra.mxu0 0.0
        %434 = vmatprep.subr.mxu0 0.0
        %435 = vmatpush2.msra.mxu0 0.0
        %436 = vmatprep.subr.mxu0 0.0
        %437 = vmatpush2.msra.mxu0 0.0
        %438 = vmatprep.subr.mxu0 0.0
        %439 = vmatpush2.msra.mxu0 0.0
        %440 = vmatprep.subr.mxu0 0.0
        %441 = vmatpush2.msra.mxu0 0.0
        %442 = vmatprep.subr.mxu0 0.0
        %443 = vmatpush2.msra.mxu0 0.0
        %444 = vmatprep.subr.mxu0 0.0
        %445 = vmatpush2.msra.mxu0 0.0
        %446 = vmatprep.subr.mxu0 0.0
        %447 = vmatpush2.msra.mxu0 0.0
        %448 = vmatprep.subr.mxu0 0.0
        %449 = vmatpush2.msra.mxu0 0.0
        %450 = vmatprep.subr.mxu0 0.0
        %451 = vmatpush2.msra.mxu0 0.0
        %452 = vmatprep.subr.mxu0 0.0
        %453 = vmatpush2.msra.mxu0 0.0
        %454 = vmatprep.subr.mxu0 0.0
        %455 = vmatpush2.msra.mxu0 0.0
        %456 = vmatprep.subr.mxu0 0.0
        %457 = vmatpush2.msra.mxu0 0.0
        %458 = vmatprep.mubr.f32.mxu0 0.0
        %459 = vmatmul.mubr.f32.gmra.mxu0 %v389
        %v460 = vpop.f32.mrf.mxu0
        %v461 = vadd.f32 %v380, %v460
        %v462 = vpop.f32.mrf.mxu0
        %463 = vmatprep.mubr.f32.mxu0 0.0
        %464 = vmatmul.mubr.f32.gmra.mxu0 %v392
        %v465 = vpop.f32.mrf.mxu0
        %v466 = vadd.f32 %v385, %v465
        %v467 = vpop.f32.mrf.mxu0
        %468 = vdwg.mxu0
        %469 = vmatprep.subr.mxu0 0.0
        %470 = vmatpush1.msra.mxu0 0.0
        %471 = vmatprep.subr.mxu0 0.0
        %472 = vmatpush1.msra.mxu0 0.0
        %473 = vmatprep.subr.mxu0 0.0
        %474 = vmatpush1.msra.mxu0 0.0
        %475 = vmatprep.subr.mxu0 0.0
        %476 = vmatpush1.msra.mxu0 0.0
        %477 = vmatprep.subr.mxu0 0.0
        %478 = vmatpush1.msra.mxu0 0.0
        %479 = vmatprep.subr.mxu0 0.0
        %480 = vmatpush1.msra.mxu0 0.0
        %481 = vmatprep.subr.mxu0 0.0
        %482 = vmatpush1.msra.mxu0 0.0
        %483 = vmatprep.subr.mxu0 0.0
        %484 = vmatpush1.msra.mxu0 0.0
        %485 = vmatprep.subr.mxu0 0.0
        %486 = vmatpush1.msra.mxu0 0.0
        %487 = vmatprep.subr.mxu0 0.0
        %488 = vmatpush1.msra.mxu0 0.0
        %489 = vmatprep.subr.mxu0 0.0
        %490 = vmatpush1.msra.mxu0 0.0
        %491 = vmatprep.subr.mxu0 0.0
        %492 = vmatpush1.msra.mxu0 0.0
        %493 = vmatprep.subr.mxu0 0.0
        %494 = vmatpush1.msra.mxu0 0.0
        %495 = vmatprep.subr.mxu0 0.0
        %496 = vmatpush1.msra.mxu0 0.0
        %497 = vmatprep.subr.mxu0 0.0
        %498 = vmatpush1.msra.mxu0 %v368
        %499 = vmatprep.subr.mxu0 0.0
        %500 = vmatpush1.msra.mxu0 %v367
        %501 = vmatprep.subr.mxu0 0.0
        %502 = vmatpush2.msra.mxu0 0.0
        %503 = vmatprep.subr.mxu0 0.0
        %504 = vmatpush2.msra.mxu0 0.0
        %505 = vmatprep.subr.mxu0 0.0
        %506 = vmatpush2.msra.mxu0 0.0
        %507 = vmatprep.subr.mxu0 0.0
        %508 = vmatpush2.msra.mxu0 0.0
        %509 = vmatprep.subr.mxu0 0.0
        %510 = vmatpush2.msra.mxu0 0.0
        %511 = vmatprep.subr.mxu0 0.0
        %512 = vmatpush2.msra.mxu0 0.0
        %513 = vmatprep.subr.mxu0 0.0
        %514 = vmatpush2.msra.mxu0 0.0
        %515 = vmatprep.subr.mxu0 0.0
        %516 = vmatpush2.msra.mxu0 0.0
        %517 = vmatprep.subr.mxu0 0.0
        %518 = vmatpush2.msra.mxu0 0.0
        %519 = vmatprep.subr.mxu0 0.0
        %520 = vmatpush2.msra.mxu0 0.0
        %521 = vmatprep.subr.mxu0 0.0
        %522 = vmatpush2.msra.mxu0 0.0
        %523 = vmatprep.subr.mxu0 0.0
        %524 = vmatpush2.msra.mxu0 0.0
        %525 = vmatprep.subr.mxu0 0.0
        %526 = vmatpush2.msra.mxu0 0.0
        %527 = vmatprep.subr.mxu0 0.0
        %528 = vmatpush2.msra.mxu0 0.0
        %529 = vmatprep.subr.mxu0 0.0
        %530 = vmatpush2.msra.mxu0 0.0
        %531 = vmatprep.subr.mxu0 0.0
        %532 = vmatpush2.msra.mxu0 0.0
        %533 = vmatprep.mubr.f32.mxu0 0.0
        %534 = vmatmul.mubr.f32.gmra.mxu0 %v389
        %v535 = vpop.f32.mrf.mxu0
        %v536 = vadd.f32 %v380, %v535
        %v537 = vpop.f32.mrf.mxu0
        %538 = vmatprep.mubr.f32.mxu0 0.0
        %539 = vmatmul.mubr.f32.gmra.mxu0 %v392
        %v540 = vpop.f32.mrf.mxu0
        %v541 = vadd.f32 %v385, %v540
        %v542 = vpop.f32.mrf.mxu0
        %543 = vdwg.mxu0
        %544 = vmatprep.subr.mxu0 0.0
        %545 = vmatpush1.msra.mxu0 0.0
        %546 = vmatprep.subr.mxu0 0.0
        %547 = vmatpush1.msra.mxu0 0.0
        %548 = vmatprep.subr.mxu0 0.0
        %549 = vmatpush1.msra.mxu0 0.0
        %550 = vmatprep.subr.mxu0 0.0
        %551 = vmatpush1.msra.mxu0 0.0
        %552 = vmatprep.subr.mxu0 0.0
        %553 = vmatpush1.msra.mxu0 0.0
        %554 = vmatprep.subr.mxu0 0.0
        %555 = vmatpush1.msra.mxu0 0.0
        %556 = vmatprep.subr.mxu0 0.0
        %557 = vmatpush1.msra.mxu0 0.0
        %558 = vmatprep.subr.mxu0 0.0
        %559 = vmatpush1.msra.mxu0 0.0
        %560 = vmatprep.subr.mxu0 0.0
        %561 = vmatpush1.msra.mxu0 0.0
        %562 = vmatprep.subr.mxu0 0.0
        %563 = vmatpush1.msra.mxu0 0.0
        %564 = vmatprep.subr.mxu0 0.0
        %565 = vmatpush1.msra.mxu0 0.0
        %566 = vmatprep.subr.mxu0 0.0
        %567 = vmatpush1.msra.mxu0 0.0
        %568 = vmatprep.subr.mxu0 0.0
        %569 = vmatpush1.msra.mxu0 0.0
        %570 = vmatprep.subr.mxu0 0.0
        %571 = vmatpush1.msra.mxu0 0.0
        %572 = vmatprep.subr.mxu0 0.0
        %573 = vmatpush1.msra.mxu0 %v370
        %574 = vmatprep.subr.mxu0 0.0
        %575 = vmatpush1.msra.mxu0 %v369
        %576 = vmatprep.subr.mxu0 0.0
        %577 = vmatpush2.msra.mxu0 0.0
        %578 = vmatprep.subr.mxu0 0.0
        %579 = vmatpush2.msra.mxu0 0.0
        %580 = vmatprep.subr.mxu0 0.0
        %581 = vmatpush2.msra.mxu0 0.0
        %582 = vmatprep.subr.mxu0 0.0
        %583 = vmatpush2.msra.mxu0 0.0
        %584 = vmatprep.subr.mxu0 0.0
        %585 = vmatpush2.msra.mxu0 0.0
        %586 = vmatprep.subr.mxu0 0.0
        %587 = vmatpush2.msra.mxu0 0.0
        %588 = vmatprep.subr.mxu0 0.0
        %589 = vmatpush2.msra.mxu0 0.0
        %590 = vmatprep.subr.mxu0 0.0
        %591 = vmatpush2.msra.mxu0 0.0
        %592 = vmatprep.subr.mxu0 0.0
        %593 = vmatpush2.msra.mxu0 0.0
        %594 = vmatprep.subr.mxu0 0.0
        %595 = vmatpush2.msra.mxu0 0.0
        %596 = vmatprep.subr.mxu0 0.0
        %597 = vmatpush2.msra.mxu0 0.0
        %598 = vmatprep.subr.mxu0 0.0
        %599 = vmatpush2.msra.mxu0 0.0
        %600 = vmatprep.subr.mxu0 0.0
        %601 = vmatpush2.msra.mxu0 0.0
        %602 = vmatprep.subr.mxu0 0.0
        %603 = vmatpush2.msra.mxu0 0.0
        %604 = vmatprep.subr.mxu0 0.0
        %605 = vmatpush2.msra.mxu0 0.0
        %606 = vmatprep.subr.mxu0 0.0
        %607 = vmatpush2.msra.mxu0 0.0
        %608 = vmatprep.mubr.f32.mxu0 0.0
        %609 = vmatmul.mubr.f32.gmra.mxu0 %v389
        %v610 = vpop.f32.mrf.mxu0
        %v611 = vadd.f32 %v380, %v610
        %v612 = vpop.f32.mrf.mxu0
        %613 = vmatprep.mubr.f32.mxu0 0.0
        %614 = vmatmul.mubr.f32.gmra.mxu0 %v392
        %v615 = vpop.f32.mrf.mxu0
        %v616 = vadd.f32 %v385, %v615
        %v617 = vpop.f32.mrf.mxu0
        %618 = vdwg.mxu0
        %619 = vmatprep.subr.mxu0 0.0
        %620 = vmatpush1.msra.mxu0 0.0
        %621 = vmatprep.subr.mxu0 0.0
        %622 = vmatpush1.msra.mxu0 0.0
        %623 = vmatprep.subr.mxu0 0.0
        %624 = vmatpush1.msra.mxu0 0.0
        %625 = vmatprep.subr.mxu0 0.0
        %626 = vmatpush1.msra.mxu0 0.0
        %627 = vmatprep.subr.mxu0 0.0
        %628 = vmatpush1.msra.mxu0 0.0
        %629 = vmatprep.subr.mxu0 0.0
        %630 = vmatpush1.msra.mxu0 0.0
        %631 = vmatprep.subr.mxu0 0.0
        %632 = vmatpush1.msra.mxu0 0.0
        %633 = vmatprep.subr.mxu0 0.0
        %634 = vmatpush1.msra.mxu0 0.0
        %635 = vmatprep.subr.mxu0 0.0
        %636 = vmatpush1.msra.mxu0 0.0
        %637 = vmatprep.subr.mxu0 0.0
        %638 = vmatpush1.msra.mxu0 0.0
        %639 = vmatprep.subr.mxu0 0.0
        %640 = vmatpush1.msra.mxu0 0.0
        %641 = vmatprep.subr.mxu0 0.0
        %642 = vmatpush1.msra.mxu0 0.0
        %643 = vmatprep.subr.mxu0 0.0
        %644 = vmatpush1.msra.mxu0 0.0
        %645 = vmatprep.subr.mxu0 0.0
        %646 = vmatpush1.msra.mxu0 0.0
        %647 = vmatprep.subr.mxu0 0.0
        %648 = vmatpush1.msra.mxu0 %v372
        %649 = vmatprep.subr.mxu0 0.0
        %650 = vmatpush1.msra.mxu0 %v371
        %651 = vmatprep.subr.mxu0 0.0
        %652 = vmatpush2.msra.mxu0 0.0
        %653 = vmatprep.subr.mxu0 0.0
        %654 = vmatpush2.msra.mxu0 0.0
        %655 = vmatprep.subr.mxu0 0.0
        %656 = vmatpush2.msra.mxu0 0.0
        %657 = vmatprep.subr.mxu0 0.0
        %658 = vmatpush2.msra.mxu0 0.0
        %659 = vmatprep.subr.mxu0 0.0
        %660 = vmatpush2.msra.mxu0 0.0
        %661 = vmatprep.subr.mxu0 0.0
        %662 = vmatpush2.msra.mxu0 0.0
        %663 = vmatprep.subr.mxu0 0.0
        %664 = vmatpush2.msra.mxu0 0.0
        %665 = vmatprep.subr.mxu0 0.0
        %666 = vmatpush2.msra.mxu0 0.0
        %667 = vmatprep.subr.mxu0 0.0
        %668 = vmatpush2.msra.mxu0 0.0
        %669 = vmatprep.subr.mxu0 0.0
        %670 = vmatpush2.msra.mxu0 0.0
        %671 = vmatprep.subr.mxu0 0.0
        %672 = vmatpush2.msra.mxu0 0.0
        %673 = vmatprep.subr.mxu0 0.0
        %674 = vmatpush2.msra.mxu0 0.0
        %675 = vmatprep.subr.mxu0 0.0
        %676 = vmatpush2.msra.mxu0 0.0
        %677 = vmatprep.subr.mxu0 0.0
        %678 = vmatpush2.msra.mxu0 0.0
        %679 = vmatprep.subr.mxu0 0.0
        %680 = vmatpush2.msra.mxu0 0.0
        %681 = vmatprep.subr.mxu0 0.0
        %682 = vmatpush2.msra.mxu0 0.0
        %683 = vmatprep.mubr.f32.mxu0 0.0
        %684 = vmatmul.mubr.f32.gmra.mxu0 %v389
        %v685 = vpop.f32.mrf.mxu0
        %v686 = vadd.f32 %v380, %v685
        %v687 = vpop.f32.mrf.mxu0
        %688 = vmatprep.mubr.f32.mxu0 0.0
        %689 = vmatmul.mubr.f32.gmra.mxu0 %v392
        %v690 = vpop.f32.mrf.mxu0
        %v691 = vadd.f32 %v385, %v690
        %v692 = vpop.f32.mrf.mxu0
        %693 = vdwg.mxu0
        %v694 = vmul.f32 %v461, 0.5
        %v695 = vmul.f32 %v466, 0.5
        %v696 = vmul.f32 %v536, 0.5
        %v697 = vmul.f32 %v541, 0.5
        %v698 = vmul.f32 %v611, 0.5
        %v699 = vmul.f32 %v616, 0.5
        %v700 = vmul.f32 %v686, 0.5
        %v701 = vmul.f32 %v691, 0.5
        %v702 = vmul.f32 %v461, 0.70710677
        %v703 = vmul.f32 %v466, 0.70710677
        %v704 = vmul.f32 %v536, 0.70710677
        %v705 = vmul.f32 %v541, 0.70710677
        %v706 = vmul.f32 %v611, 0.70710677
        %v707 = vmul.f32 %v616, 0.70710677
        %v708 = vmul.f32 %v686, 0.70710677
        %v709 = vmul.f32 %v691, 0.70710677
        %v710 = verf.f32.pop %v702
        %v711 = verf.f32.pop %v703
        %v712 = verf.f32.pop %v704
        %v713 = verf.f32.pop %v705
        %v714 = verf.f32.pop %v706
        %v715 = verf.f32.pop %v707
        %v716 = verf.f32.pop %v708
        %v717 = verf.f32.pop %v709
        %v718 = vadd.f32 %v710, 1.0
        %v719 = vadd.f32 %v711, 1.0
        %v720 = vadd.f32 %v712, 1.0
        %v721 = vadd.f32 %v713, 1.0
        %v722 = vadd.f32 %v714, 1.0
        %v723 = vadd.f32 %v715, 1.0
        %v724 = vadd.f32 %v716, 1.0
        %v725 = vadd.f32 %v717, 1.0
        %v726 = vmul.f32 %v694, %v718
        %v727 = vmul.f32 %v695, %v719
        %v728 = vmul.f32 %v696, %v720
        %v729 = vmul.f32 %v697, %v721
        %v730 = vmul.f32 %v698, %v722
        %v731 = vmul.f32 %v699, %v723
        %v732 = vmul.f32 %v700, %v724
        %v733 = vmul.f32 %v701, %v725
        %v734 = vadd.f32 %v726, 1.0
        %v735 = vadd.f32 %v727, 1.0
        %v736 = vadd.f32 %v728, 1.0
        %v737 = vadd.f32 %v729, 1.0
        %v738 = vadd.f32 %v730, 1.0
        %v739 = vadd.f32 %v731, 1.0
        %v740 = vadd.f32 %v732, 1.0
        %v741 = vadd.f32 %v733, 1.0
        %v742 = vmul.f32 %v246, %v734
        %v743 = vmul.f32 %v247, %v735
        %v744 = vmul.f32 %v248, %v736
        %v745 = vmul.f32 %v249, %v737
        %v746 = vmul.f32 %v250, %v738
        %v747 = vmul.f32 %v251, %v739
        %v748 = vmul.f32 %v252, %v740
        %v749 = vmul.f32 %v253, %v741
        %750 = vst [vmem:[%s243] sm:$0xff] %v742
        %751 = vst [vmem:[%s243 + $0x8] sm:$0xff] %v743
        %752 = vst [vmem:[%s243 + $0x10] sm:$0xff] %v744
        %753 = vst [vmem:[%s243 + $0x18] sm:$0xff] %v745
        %754 = vst [vmem:[%s243 + $0x20] sm:$0xff] %v746
        %755 = vst [vmem:[%s243 + $0x28] sm:$0xff] %v747
        %756 = vst [vmem:[%s243 + $0x30] sm:$0xff] %v748
        %757 = vst [vmem:[%s243 + $0x38] sm:$0xff] %v749
        %s758 = sand.u32 %s140, 1
        %s759 = scalar_lea.sflag [#allocation4], %s758
        %s760 = sand.u32 %s140, 1
        %s761 = smul.addr %s760, 64
        %s762 = scalar_lea.vmem [#allocation5], %s761
        // Predicated region
        $region45: #{tpu_custom_call.1} parent=39 // pred_check
          %p763 = pneg %p150
        $region46: #{tpu_custom_call.1} parent=39 // pred_check_branch
          %765 = sbr.rel (%p763) target = $region48
        $region47: #{tpu_custom_call.1} parent=39 // pred_region
          %s766 = smul.u32 4, %s22
          %s768 = ssub.s32 1024, 1024
          %769 = vsyncadd %s759, %s768
          %s770 = smul.addr %s766, 2
          %s771 = smul.addr %s770, 128
          %s772 = scalar_lea.hbm %s5, %s771
          %s773 = sshll.u32 %s762, 4
          %s774 = int_to_ptr.vmem [resolvable:$true] %s773
          %779 = dma.vmem_to_hbm [thread:$0]  %s774, 1024, %s772, %s759, 128, 128, 8
        $region48: #{tpu_custom_call.1} parent=39 // pred_fallthru
          _
      $region40: #{tpu_custom_call.1} parent=5 // pred_fallthru
        _
      %p780 = scmp.le.s32.totalorder 2, %s17
      // Predicated region
      $region49: #{tpu_custom_call.1} parent=5 // pred_check
        %p781 = pneg %p780
      $region50: #{tpu_custom_call.1} parent=5 // pred_check_branch
        %783 = sbr.rel (%p781) target = $region52
      $region51: #{tpu_custom_call.1} parent=5 // pred_region
        %s784 = ssub.s32 %s17, 2
        // Predicated region
        $region53: #{tpu_custom_call.1} parent=51 // pred_check
          %p785 = pneg %p156
        $region54: #{tpu_custom_call.1} parent=51 // pred_check_branch
          %787 = sbr.rel (%p785) target = $region56
        $region55: #{tpu_custom_call.1} parent=51 // pred_region
          %s788 = sand.u32 %s141, 1
          %s789 = scalar_lea.sflag [#allocation4], %s788
          %s790 = sand.u32 %s141, 1
          %s791 = smul.addr %s790, 64
          %s792 = scalar_lea.vmem [#allocation5], %s791
          %793 = dma.done %s789, 1024
        $region56: #{tpu_custom_call.1} parent=51 // pred_fallthru
          _
      $region52: #{tpu_custom_call.1} parent=5 // pred_fallthru
        _
    $region6: #{tpu_custom_call.1} parent=1 // loop_footer
      %s21 = sadd.s32 1, %s17
    $region7: #{tpu_custom_call.1} parent=1 // loop_footer_branch
      %16 = sbr.rel target = $region3
    $region8: #{tpu_custom_call.1} parent=1 // loop_exit
      _
    %794 = vsyncpa [#allocation3], 1
    %s795 = scalar_lea.sflag [#allocation3], 1
    %796 = vsyncpa %s795, 1
    %797 = vsyncpa [#allocation4], 1
    %s798 = scalar_lea.sflag [#allocation4], 1
    %799 = vsyncpa %s798, 1

</llo_original>
